<compile_context>
chip_gen: v6e
topology: v6e:2x2x1
jax: 0.10.0
libtpu: 0.0.40
codegen_flags: <defaults>
</compile_context>

<pallas_src>
import jax
import jax.numpy as jnp
from jax import lax
from jax.experimental import pallas as pl
from jax.experimental.pallas import tpu as pltpu

LANE = 128      # lane width / contraction-dim padding
SUBLANE = 16    # bf16 sublane packing (enough for the hidden dim)


def _round_up(x: int, m: int) -> int:
    return ((x + m - 1) // m) * m


def _fused_kernel(uid_ref, rid_ref, table_ref, b1_ref, w2_ref, scal_ref, out_ref):
    """One batch tile (TB batch elements on the lane axis), fully fused forward."""
    uid = uid_ref[...]                         # [1, TB] int32, user row in [0, NU_pad)
    rid = rid_ref[...]                         # [1, TB] int32, recipe row (pre-shifted by NU_pad)

    nt = table_ref.shape[1]                    # NU_pad + NR_pad
    tb = uid.shape[1]

    # Combined one-hot for the concatenated table.  Compare/select stays int32/f32 on the
    # VPU; cast to bf16 (exact for 0/1) only for the MXU operand.
    row = lax.broadcasted_iota(jnp.int32, (nt, tb), 0)
    hit = (row == uid) | (row == rid)          # never both: uid < NU_pad <= rid
    oh = jnp.where(hit, 1.0, 0.0).astype(jnp.bfloat16)            # [NT, TB]

    # Gather + concat + first Linear in ONE small matmul (W1 pre-folded into the table).
    h_t = jnp.dot(table_ref[...], oh, preferred_element_type=jnp.float32) + b1_ref[...]
    h_t = jnp.maximum(h_t, 0.0)                # [H_pad, TB], ReLU

    # TODO(synk): embedDropout / hidden-layer Dropout are identity in eval mode;
    # training-mode stochastic dropout is not implemented here.

    # Output Linear as VPU broadcast-multiply + sublane reduce (no 1-wide MXU matmul).
    y = jnp.sum(h_t * w2_ref[...], axis=0, keepdims=True)         # [1, TB]

    min_r = scal_ref[0]
    max_r = scal_ref[1]
    b2 = scal_ref[2]
    y = jax.nn.sigmoid(y + b2)
    out_ref[...] = y * (max_r - min_r + 1.0) + min_r - 0.5         # lane-dense full store


def embedding_network_forward(user_ids, recipe_ids, params, minmax=None, *, block_batch=512):
    """Forward pass matching EmbeddingNetwork.forward(users, recipes, minmax).

    block_batch: batch lanes per grid step (rounded to a multiple of 128).
                 512 is a good default on v5e; use 1024 on v6e for large batches.
    """
    users = params["users"].astype(jnp.float32)         # [nU, F]
    recipes = params["recipes"].astype(jnp.float32)     # [nR, F]
    w1 = params["w1"].astype(jnp.float32)               # [2F, H]  (x @ w1 + b1)
    b1 = params["b1"].astype(jnp.float32).reshape(-1)   # [H]
    w2 = params["w2"].astype(jnp.float32).reshape(-1)   # [H]      (h @ w2 + b2)
    b2 = jnp.asarray(params["b2"], jnp.float32).reshape(())

    n_users, f = users.shape
    n_recipes = recipes.shape[0]
    hidden = w1.shape[1]

    nup = _round_up(n_users, LANE)      # lane / contraction dims -> multiples of 128
    nrp = _round_up(n_recipes, LANE)
    ntp = nup + nrp
    hp = _round_up(hidden, SUBLANE)     # sublane-only dim -> multiple of 16 (NOT 128)

    # Fold the first Linear into the tables offline (full f32 precision, one-time cost),
    # then store one concatenated bf16 table [H_pad, NU_pad + NR_pad].
    pu_t = jnp.dot(w1[:f, :].T, users.T, precision=lax.Precision.HIGHEST)     # [H, nU]
    pr_t = jnp.dot(w1[f:, :].T, recipes.T, precision=lax.Precision.HIGHEST)   # [H, nR]
    table = jnp.zeros((hp, ntp), jnp.float32)
    table = table.at[:hidden, :n_users].set(pu_t)
    table = table.at[:hidden, nup:nup + n_recipes].set(pr_t)
    table = table.astype(jnp.bfloat16)

    b1_t = jnp.zeros((hp, 1), jnp.float32).at[:hidden, 0].set(b1)   # pad MUST stay 0
    w2_t = jnp.zeros((hp, 1), jnp.float32).at[:hidden, 0].set(w2)   # pad MUST stay 0

    # Batch ids on the lane axis; recipe ids are pre-shifted into the concatenated table.
    b = user_ids.shape[0]
    block_batch = max(LANE, _round_up(block_batch, LANE))
    if b > LANE:
        # Keep >= 2 grid steps so v7x can split the batch across its two TensorCores.
        tb = min(block_batch, _round_up(-(-b // 2), LANE))
    else:
        tb = min(block_batch, LANE)
    b_pad = _round_up(b, tb)
    uid = jnp.zeros((1, b_pad), jnp.int32).at[0, :b].set(user_ids.astype(jnp.int32))
    rid = jnp.zeros((1, b_pad), jnp.int32).at[0, :b].set(recipe_ids.astype(jnp.int32) + nup)

    if minmax is None:
        min_r, max_r = 0.5, 0.5     # y*(max-min+1)+min-0.5 == y  (identity)
    else:
        min_r, max_r = minmax
    scal = jnp.stack([jnp.asarray(min_r, jnp.float32),
                      jnp.asarray(max_r, jnp.float32),
                      b2])                                    # SMEM: [min, max, b2]

    grid = (b_pad // tb,)
    out = pl.pallas_call(
        _fused_kernel,
        out_shape=jax.ShapeDtypeStruct((1, b_pad), jnp.float32),
        grid_spec=pltpu.PrefetchScalarGridSpec(
            num_scalar_prefetch=0,
            grid=grid,
            in_specs=[
                pl.BlockSpec((1, tb), lambda i: (0, i)),          # user ids (lane-dense)
                pl.BlockSpec((1, tb), lambda i: (0, i)),          # shifted recipe ids
                pl.BlockSpec((hp, ntp), lambda i: (0, 0),         # folded table, resident,
                             pipeline_mode=pl.Buffered(1)),       #   single-buffered
                pl.BlockSpec((hp, 1), lambda i: (0, 0)),          # b1^T (zero-padded)
                pl.BlockSpec((hp, 1), lambda i: (0, 0)),          # w2^T (zero-padded)
                pl.BlockSpec(memory_space=pltpu.MemorySpace.SMEM),  # [min, max, b2]
            ],
            out_specs=pl.BlockSpec((1, tb), lambda i: (0, i)),    # lane-dense output
        ),
        compiler_params=pltpu.CompilerParams(
            dimension_semantics=("parallel",),        # shard batch tiles over v7x's 2 TCs
            vmem_limit_bytes=32 * 1024 * 1024,        # headroom over v5e's 16 MiB default
        ),
    )(uid, rid, table, b1_t, w2_t, scal)

    return out[0, :b].reshape(b, 1)


def _reference_forward(user_ids, recipe_ids, params, minmax):
    """Plain-JAX reference of the same forward pass (f32, highest precision)."""
    u = jnp.take(params["users"], user_ids, axis=0)
    r = jnp.take(params["recipes"], recipe_ids, axis=0)
    feat = jnp.concatenate([u, r], axis=1)
    h = jnp.maximum(
        jnp.dot(feat, params["w1"], precision=lax.Precision.HIGHEST) + params["b1"], 0.0)
    y = jax.nn.sigmoid(
        jnp.dot(h, params["w2"], precision=lax.Precision.HIGHEST) + params["b2"])
    if minmax is not None:
        min_r, max_r = minmax
        y = y * (max_r - min_r + 1.0) + min_r - 0.5
    return y


def init_params(key, n_users, n_recipes, n_factors, hidden):
    """Deterministic init mirroring EmbeddingNetwork._init():
       embeddings ~ U(-0.05, 0.05); Linear weights xavier_uniform; biases = 0.01."""
    k_u, k_r, k_w1, k_w2 = jax.random.split(key, 4)
    n_in = 2 * n_factors

    def xavier(k, fan_in, fan_out):
        bound = (6.0 / (fan_in + fan_out)) ** 0.5
        return jax.random.uniform(k, (fan_in, fan_out), jnp.float32, -bound, bound)

    return {
        "users": jax.random.uniform(k_u, (n_users, n_factors), jnp.float32, -0.05, 0.05),
        "recipes": jax.random.uniform(k_r, (n_recipes, n_factors), jnp.float32, -0.05, 0.05),
        "w1": xavier(k_w1, n_in, hidden),
        "b1": jnp.full((1, hidden), 0.01, jnp.float32),
        "w2": xavier(k_w2, hidden, 1),
        "b2": jnp.full((1, 1), 0.01, jnp.float32),
    }


if __name__ == "__main__":
    # Module-consistent small shapes: nFactors=50 (default), hiddenLayers=10 (default).
    n_users, n_recipes, n_factors, hidden = 40, 60, 50, 10
    batch = 8

    key = jax.random.PRNGKey(0)
    k_params, k_uid, k_rid = jax.random.split(key, 3)

    params = init_params(k_params, n_users, n_recipes, n_factors, hidden)
    user_ids = jax.random.randint(k_uid, (batch,), 0, n_users, dtype=jnp.int32)
    recipe_ids = jax.random.randint(k_rid, (batch,), 0, n_recipes, dtype=jnp.int32)
    minmax = (1.0, 5.0)  # (min_rating, max_rating)

    out = embedding_network_forward(user_ids, recipe_ids, params, minmax)
    out = jax.block_until_ready(out)
    assert out.shape == (batch, 1)

    ref = _reference_forward(user_ids, recipe_ids, params, minmax)
    ref = jax.block_until_ready(ref)
    assert jnp.allclose(out, ref, rtol=1e-3, atol=1e-3), (out, ref)

    print("KERNEL_OK")
</pallas_src>

<mosaic_0001>
module attributes {stable_mosaic.version = 11 : i64} {
  func.func @_fused_kernel(%arg0: i32, %arg1: memref<1x128xi32, #tpu.memory_space<vmem>>, %arg2: memref<1x128xi32, #tpu.memory_space<vmem>>, %arg3: memref<16x256xbf16, #tpu.memory_space<vmem>>, %arg4: memref<16x1xf32, #tpu.memory_space<vmem>>, %arg5: memref<16x1xf32, #tpu.memory_space<vmem>>, %arg6: memref<3xf32, #tpu.memory_space<smem>>, %arg7: memref<1x128xf32, #tpu.memory_space<vmem>>) attributes {dimension_semantics = [#tpu.dimension_semantics<parallel>], iteration_bounds = array<i64: 1>, scalar_prefetch = 0 : i64, scratch_operands = 0 : i64, tpu.core_type = #tpu.core_type<tc>, window_params = [{transform_indices = @transform_0, window_bounds = array<i64: 1, 128>}, {transform_indices = @transform_1, window_bounds = array<i64: 1, 128>}, {pipeline_mode = #tpu.pipeline_mode<synchronous>, transform_indices = @transform_2, window_bounds = array<i64: 16, 256>}, {pipeline_mode = #tpu.pipeline_mode<synchronous>, transform_indices = @transform_3, window_bounds = array<i64: 16, 1>}, {pipeline_mode = #tpu.pipeline_mode<synchronous>, transform_indices = @transform_4, window_bounds = array<i64: 16, 1>}, {transform_indices = @transform_5, window_bounds = array<i64: 3>}, {transform_indices = @transform_6, window_bounds = array<i64: 1, 128>}]} {
    %c0 = arith.constant 0 : index
    %c0_0 = arith.constant 0 : index
    %0 = vector.load %arg1[%c0, %c0_0] : memref<1x128xi32, #tpu.memory_space<vmem>>, vector<1x128xi32>
    %c0_1 = arith.constant 0 : index
    %c0_2 = arith.constant 0 : index
    %1 = vector.load %arg2[%c0_1, %c0_2] : memref<1x128xi32, #tpu.memory_space<vmem>>, vector<1x128xi32>
    %2 = tpu.iota {dimensions = array<i32: 0>} : vector<256x128xi32>
    %3 = vector.broadcast %0 : vector<1x128xi32> to vector<256x128xi32>
    %4 = arith.cmpi eq, %2, %3 : vector<256x128xi32>
    %5 = vector.broadcast %1 : vector<1x128xi32> to vector<256x128xi32>
    %6 = arith.cmpi eq, %2, %5 : vector<256x128xi32>
    %7 = arith.ori %4, %6 : vector<256x128xi1>
    %cst = arith.constant 1.000000e+00 : f32
    %cst_3 = arith.constant 0.000000e+00 : f32
    %8 = vector.broadcast %cst : f32 to vector<256x128xf32>
    %9 = vector.broadcast %cst_3 : f32 to vector<256x128xf32>
    %10 = arith.select %7, %8, %9 : vector<256x128xi1>, vector<256x128xf32>
    %11 = arith.truncf %10 : vector<256x128xf32> to vector<256x128xbf16>
    %c0_4 = arith.constant 0 : index
    %c0_5 = arith.constant 0 : index
    %12 = vector.load %arg3[%c0_4, %c0_5] : memref<16x256xbf16, #tpu.memory_space<vmem>>, vector<16x256xbf16>
    %cst_6 = arith.constant dense<0.000000e+00> : vector<16x128xf32>
    %13 = tpu.matmul %12, %11, %cst_6 {dimension_numbers = #tpu.dot_dimension_numbers<[1], [0], [0], [1], [0, 0, 1, 1], [], []>} : vector<16x256xbf16>, vector<256x128xbf16>, vector<16x128xf32> -> vector<16x128xf32>
    %c0_7 = arith.constant 0 : index
    %c0_8 = arith.constant 0 : index
    %14 = vector.load %arg4[%c0_7, %c0_8] : memref<16x1xf32, #tpu.memory_space<vmem>>, vector<16x1xf32>
    %15 = vector.broadcast %14 : vector<16x1xf32> to vector<16x128xf32>
    %16 = arith.addf %13, %15 : vector<16x128xf32>
    %cst_9 = arith.constant 0.000000e+00 : f32
    %17 = vector.broadcast %cst_9 : f32 to vector<16x128xf32>
    %18 = arith.maximumf %16, %17 : vector<16x128xf32>
    %c0_10 = arith.constant 0 : index
    %c0_11 = arith.constant 0 : index
    %19 = vector.load %arg5[%c0_10, %c0_11] : memref<16x1xf32, #tpu.memory_space<vmem>>, vector<16x1xf32>
    %20 = vector.broadcast %19 : vector<16x1xf32> to vector<16x128xf32>
    %21 = arith.mulf %18, %20 : vector<16x128xf32>
    %cst_12 = arith.constant dense<0.000000e+00> : vector<128xf32>
    %22 = vector.multi_reduction <add>, %21, %cst_12 [0] : vector<16x128xf32> to vector<128xf32>
    %23 = vector.shape_cast %22 : vector<128xf32> to vector<1x128xf32>
    %c0_13 = arith.constant 0 : index
    %24 = memref.load %arg6[%c0_13] : memref<3xf32, #tpu.memory_space<smem>>
    %c1 = arith.constant 1 : index
    %25 = memref.load %arg6[%c1] : memref<3xf32, #tpu.memory_space<smem>>
    %c2 = arith.constant 2 : index
    %26 = memref.load %arg6[%c2] : memref<3xf32, #tpu.memory_space<smem>>
    %27 = vector.broadcast %26 : f32 to vector<1x128xf32>
    %28 = arith.addf %23, %27 : vector<1x128xf32>
    %29 = arith.negf %28 : vector<1x128xf32>
    %30 = math.exp %29 : vector<1x128xf32>
    %cst_14 = arith.constant 1.000000e+00 : f32
    %31 = vector.broadcast %cst_14 : f32 to vector<1x128xf32>
    %32 = arith.addf %31, %30 : vector<1x128xf32>
    %33 = arith.divf %31, %32 : vector<1x128xf32>
    %34 = arith.subf %25, %24 : f32
    %cst_15 = arith.constant 1.000000e+00 : f32
    %35 = arith.addf %34, %cst_15 : f32
    %36 = vector.broadcast %35 : f32 to vector<1x128xf32>
    %37 = arith.mulf %33, %36 : vector<1x128xf32>
    %38 = vector.broadcast %24 : f32 to vector<1x128xf32>
    %39 = arith.addf %37, %38 : vector<1x128xf32>
    %cst_16 = arith.constant 5.000000e-01 : f32
    %40 = vector.broadcast %cst_16 : f32 to vector<1x128xf32>
    %41 = arith.subf %39, %40 : vector<1x128xf32>
    %c0_17 = arith.constant 0 : index
    %c0_18 = arith.constant 0 : index
    %42 = vector.load %arg7[%c0_17, %c0_18] : memref<1x128xf32, #tpu.memory_space<vmem>>, vector<1x128xf32>
    tpu.vector_store %arg7[%c0_17, %c0_18], %41 {strides = array<i32>} : memref<1x128xf32, #tpu.memory_space<vmem>>, vector<1x128xf32>,
    return
  }
  func.func @transform_0(%arg0: i32) -> (i32, i32) {
    %c0_i32 = arith.constant 0 : i32
    %c0_i32_0 = arith.constant 0 : i32
    return %c0_i32, %arg0 : i32, i32
  }
  func.func @transform_1(%arg0: i32) -> (i32, i32) {
    %c0_i32 = arith.constant 0 : i32
    %c0_i32_0 = arith.constant 0 : i32
    return %c0_i32, %arg0 : i32, i32
  }
  func.func @transform_2(%arg0: i32) -> (i32, i32) {
    %c0_i32 = arith.constant 0 : i32
    %c0_i32_0 = arith.constant 0 : i32
    %c0_i32_1 = arith.constant 0 : i32
    return %c0_i32, %c0_i32_0 : i32, i32
  }
  func.func @transform_3(%arg0: i32) -> (i32, i32) {
    %c0_i32 = arith.constant 0 : i32
    %c0_i32_0 = arith.constant 0 : i32
    %c0_i32_1 = arith.constant 0 : i32
    return %c0_i32, %c0_i32_0 : i32, i32
  }
  func.func @transform_4(%arg0: i32) -> (i32, i32) {
    %c0_i32 = arith.constant 0 : i32
    %c0_i32_0 = arith.constant 0 : i32
    %c0_i32_1 = arith.constant 0 : i32
    return %c0_i32, %c0_i32_0 : i32, i32
  }
  func.func @transform_5(%arg0: i32) -> i32 {
    %c0_i32 = arith.constant 0 : i32
    %c0_i32_0 = arith.constant 0 : i32
    return %c0_i32 : i32
  }
  func.func @transform_6(%arg0: i32) -> (i32, i32) {
    %c0_i32 = arith.constant 0 : i32
    %c0_i32_0 = arith.constant 0 : i32
    return %c0_i32, %arg0 : i32, i32
  }
}

</mosaic_0001>

<llo_original>
// kernel: tpu_custom_call.1
$region0: #{tpu_custom_call.1}
  #allocation0 [shape = 'u32[]', space=smem, size = 0x4, offset = 0x4, fixed_abs, tag = 'smem constant byte address 0x4 - core index']
  #allocation1 [shape = 'u32[144,128]{1,0:T(1,128)}', space=vmem, size = 0x12000, scoped, tag = 'internal scratch']
  %s0 = inlined_call_operand.vmem [shape: s32[1,128], index: 0, kind: input, shape index: {}]
  %s1 = inlined_call_operand.vmem [shape: s32[1,128], index: 1, kind: input, shape index: {}]
  %s2 = inlined_call_operand.vmem [shape: bf16[16,256], index: 2, kind: input, shape index: {}]
  %s3 = inlined_call_operand.vmem [shape: f32[16,1], index: 3, kind: input, shape index: {}]
  %s4 = inlined_call_operand.vmem [shape: f32[16,1], index: 4, kind: input, shape index: {}]
  %s5 = inlined_call_operand.vmem [shape: f32[3], index: 5, kind: input, shape index: {}]
  %s6 = inlined_call_operand.hbm [shape: f32[1,128], index: 6, kind: output, shape index: {}]
  %s7 = sld [smem:[#allocation0]]
  $region38: #{tpu_custom_call.1} parent=0
    _
  %s9 = ssub.s32 1, %s7
  %s10 = scalar_select 0, %s9, %s7
  $region1: #{tpu_custom_call.1} parent=0
    #allocation2 [shape = 'u8[512]{0}', space=smem, size = 0x200, scoped, tag = 'input window, operand 5, single buffered']
    #allocation3 [shape = 's32[1]{0}', space=sflag, size = 0x4, scoped, tag = 'scoped memory for tpu_custom_call.1']
    #allocation4 [shape = 's32[1]{0}', space=sflag, size = 0x4, scoped, tag = 'scoped memory for tpu_custom_call.1']
    #allocation5 [shape = 'u8[512]{0}', space=vmem, size = 0x400, scoped, tag = 'output window, operand 0, single buffered']
    %11 = vsyncpa [#allocation4], 0
    %12 = vsyncpa [#allocation3], 0
    // Predicated region
    $region2: #{tpu_custom_call.1} parent=1 // pred_check
      _
    $region3: #{tpu_custom_call.1} parent=1 // pred_check_branch
      %14 = sbr.rel (0) target = $region5
    $region4: #{tpu_custom_call.1} parent=1 // pred_region
      _
    $region5: #{tpu_custom_call.1} parent=1 // pred_fallthru
      _
    // Predicated region
    $region6: #{tpu_custom_call.1} parent=1 // pred_check
      _
    $region7: #{tpu_custom_call.1} parent=1 // pred_check_branch
      %16 = sbr.rel (0) target = $region9
    $region8: #{tpu_custom_call.1} parent=1 // pred_region
      _
    $region9: #{tpu_custom_call.1} parent=1 // pred_fallthru
      _
    // Predicated region
    $region10: #{tpu_custom_call.1} parent=1 // pred_check
      _
    $region11: #{tpu_custom_call.1} parent=1 // pred_check_branch
      %18 = sbr.rel (0) target = $region13
    $region12: #{tpu_custom_call.1} parent=1 // pred_region
      _
    $region13: #{tpu_custom_call.1} parent=1 // pred_fallthru
      _
    // Predicated region
    $region14: #{tpu_custom_call.1} parent=1 // pred_check
      _
    $region15: #{tpu_custom_call.1} parent=1 // pred_check_branch
      %20 = sbr.rel (0) target = $region17
    $region16: #{tpu_custom_call.1} parent=1 // pred_region
      _
    $region17: #{tpu_custom_call.1} parent=1 // pred_fallthru
      _
    // Predicated region
    $region18: #{tpu_custom_call.1} parent=1 // pred_check
      _
    $region19: #{tpu_custom_call.1} parent=1 // pred_check_branch
      %22 = sbr.rel (0) target = $region21
    $region20: #{tpu_custom_call.1} parent=1 // pred_region
      _
    $region21: #{tpu_custom_call.1} parent=1 // pred_fallthru
      _
    // Predicated region
    $region22: #{tpu_custom_call.1} parent=1 // pred_check
      _
    $region23: #{tpu_custom_call.1} parent=1 // pred_check_branch
      %24 = sbr.rel (0) target = $region25
    $region24: #{tpu_custom_call.1} parent=1 // pred_region
      %s26 = ssub.s32 16, 16
      %27 = vsyncadd [#allocation4], %s26
      %s29 = sshll.u32 %s5, 4
      %s30 = int_to_ptr.vmem [resolvable:$true] %s29
      %32 = dma.vmem_to_smem %s30, 16, [#allocation2], [#allocation4]
    $region25: #{tpu_custom_call.1} parent=1 // pred_fallthru
      _
    // Predicated region
    $region26: #{tpu_custom_call.1} parent=1 // pred_check
      _
    $region27: #{tpu_custom_call.1} parent=1 // pred_check_branch
      %34 = sbr.rel (0) target = $region29
    $region28: #{tpu_custom_call.1} parent=1 // pred_region
      %35 = dma.done [#allocation4], 16
    $region29: #{tpu_custom_call.1} parent=1 // pred_fallthru
      _
    %36 = sfence
    %v38 = vld [vmem:[%s0] sm:$0x1]
    %v39 = vld [vmem:[%s1] sm:$0x1]
    %v40 = vlaneseq
    %v41 = vshrl.u32 %v40, 7
    %v42 = vadd.s32 %v41, 8
    %v43 = vadd.s32 %v41, 16
    %v44 = vadd.s32 %v41, 24
    %v45 = vadd.s32 %v41, 32
    %v46 = vadd.s32 %v41, 40
    %v47 = vadd.s32 %v41, 48
    %v48 = vadd.s32 %v41, 56
    %v49 = vadd.s32 %v41, 64
    %v50 = vadd.s32 %v41, 72
    %v51 = vadd.s32 %v41, 80
    %v52 = vadd.s32 %v41, 88
    %v53 = vadd.s32 %v41, 96
    %v54 = vadd.s32 %v41, 104
    %v55 = vadd.s32 %v41, 112
    %v56 = vadd.s32 %v41, 120
    %v57 = vadd.s32 %v41, 128
    %v58 = vadd.s32 %v41, 136
    %v59 = vadd.s32 %v41, 144
    %v60 = vadd.s32 %v41, 152
    %v61 = vadd.s32 %v41, 160
    %v62 = vadd.s32 %v41, 168
    %v63 = vadd.s32 %v41, 176
    %v64 = vadd.s32 %v41, 184
    %v65 = vadd.s32 %v41, 192
    %v66 = vadd.s32 %v41, 200
    %v67 = vadd.s32 %v41, 208
    %v68 = vadd.s32 %v41, 216
    %v69 = vadd.s32 %v41, 224
    %v70 = vadd.s32 %v41, 232
    %v71 = vadd.s32 %v41, 240
    %v72 = vadd.s32 %v41, 248
    %v73 = vlaneseq
    %v74 = vshrl.u32 %v73, 7
    %v75 = vsub.s32 0, %v74
    %v76 = vrot.slane %v38, %v75
    %vm77 = vcmp.eq.s32.totalorder %v41, %v76
    %vm78 = vcmp.eq.s32.totalorder %v42, %v76
    %vm79 = vcmp.eq.s32.totalorder %v43, %v76
    %vm80 = vcmp.eq.s32.totalorder %v44, %v76
    %vm81 = vcmp.eq.s32.totalorder %v45, %v76
    %vm82 = vcmp.eq.s32.totalorder %v46, %v76
    %vm83 = vcmp.eq.s32.totalorder %v47, %v76
    %vm84 = vcmp.eq.s32.totalorder %v48, %v76
    %vm85 = vcmp.eq.s32.totalorder %v49, %v76
    %vm86 = vcmp.eq.s32.totalorder %v50, %v76
    %vm87 = vcmp.eq.s32.totalorder %v51, %v76
    %vm88 = vcmp.eq.s32.totalorder %v52, %v76
    %vm89 = vcmp.eq.s32.totalorder %v53, %v76
    %vm90 = vcmp.eq.s32.totalorder %v54, %v76
    %vm91 = vcmp.eq.s32.totalorder %v55, %v76
    %vm92 = vcmp.eq.s32.totalorder %v56, %v76
    %vm93 = vcmp.eq.s32.totalorder %v57, %v76
    %vm94 = vcmp.eq.s32.totalorder %v58, %v76
    %vm95 = vcmp.eq.s32.totalorder %v59, %v76
    %vm96 = vcmp.eq.s32.totalorder %v60, %v76
    %vm97 = vcmp.eq.s32.totalorder %v61, %v76
    %vm98 = vcmp.eq.s32.totalorder %v62, %v76
    %vm99 = vcmp.eq.s32.totalorder %v63, %v76
    %vm100 = vcmp.eq.s32.totalorder %v64, %v76
    %vm101 = vcmp.eq.s32.totalorder %v65, %v76
    %vm102 = vcmp.eq.s32.totalorder %v66, %v76
    %vm103 = vcmp.eq.s32.totalorder %v67, %v76
    %vm104 = vcmp.eq.s32.totalorder %v68, %v76
    %vm105 = vcmp.eq.s32.totalorder %v69, %v76
    %vm106 = vcmp.eq.s32.totalorder %v70, %v76
    %vm107 = vcmp.eq.s32.totalorder %v71, %v76
    %vm108 = vcmp.eq.s32.totalorder %v72, %v76
    %v109 = vlaneseq
    %v110 = vshrl.u32 %v109, 7
    %v111 = vsub.s32 0, %v110
    %v112 = vrot.slane %v39, %v111
    %vm113 = vcmp.eq.s32.totalorder %v41, %v112
    %vm114 = vcmp.eq.s32.totalorder %v42, %v112
    %vm115 = vcmp.eq.s32.totalorder %v43, %v112
    %vm116 = vcmp.eq.s32.totalorder %v44, %v112
    %vm117 = vcmp.eq.s32.totalorder %v45, %v112
    %vm118 = vcmp.eq.s32.totalorder %v46, %v112
    %vm119 = vcmp.eq.s32.totalorder %v47, %v112
    %vm120 = vcmp.eq.s32.totalorder %v48, %v112
    %vm121 = vcmp.eq.s32.totalorder %v49, %v112
    %vm122 = vcmp.eq.s32.totalorder %v50, %v112
    %vm123 = vcmp.eq.s32.totalorder %v51, %v112
    %vm124 = vcmp.eq.s32.totalorder %v52, %v112
    %vm125 = vcmp.eq.s32.totalorder %v53, %v112
    %vm126 = vcmp.eq.s32.totalorder %v54, %v112
    %vm127 = vcmp.eq.s32.totalorder %v55, %v112
    %vm128 = vcmp.eq.s32.totalorder %v56, %v112
    %vm129 = vcmp.eq.s32.totalorder %v57, %v112
    %vm130 = vcmp.eq.s32.totalorder %v58, %v112
    %vm131 = vcmp.eq.s32.totalorder %v59, %v112
    %vm132 = vcmp.eq.s32.totalorder %v60, %v112
    %vm133 = vcmp.eq.s32.totalorder %v61, %v112
    %vm134 = vcmp.eq.s32.totalorder %v62, %v112
    %vm135 = vcmp.eq.s32.totalorder %v63, %v112
    %vm136 = vcmp.eq.s32.totalorder %v64, %v112
    %vm137 = vcmp.eq.s32.totalorder %v65, %v112
    %vm138 = vcmp.eq.s32.totalorder %v66, %v112
    %vm139 = vcmp.eq.s32.totalorder %v67, %v112
    %vm140 = vcmp.eq.s32.totalorder %v68, %v112
    %vm141 = vcmp.eq.s32.totalorder %v69, %v112
    %vm142 = vcmp.eq.s32.totalorder %v70, %v112
    %vm143 = vcmp.eq.s32.totalorder %v71, %v112
    %vm144 = vcmp.eq.s32.totalorder %v72, %v112
    %vm145 = vmor %vm77, %vm113
    %vm146 = vmor %vm78, %vm114
    %vm147 = vmor %vm79, %vm115
    %vm148 = vmor %vm80, %vm116
    %vm149 = vmor %vm81, %vm117
    %vm150 = vmor %vm82, %vm118
    %vm151 = vmor %vm83, %vm119
    %vm152 = vmor %vm84, %vm120
    %vm153 = vmor %vm85, %vm121
    %vm154 = vmor %vm86, %vm122
    %vm155 = vmor %vm87, %vm123
    %vm156 = vmor %vm88, %vm124
    %vm157 = vmor %vm89, %vm125
    %vm158 = vmor %vm90, %vm126
    %vm159 = vmor %vm91, %vm127
    %vm160 = vmor %vm92, %vm128
    %vm161 = vmor %vm93, %vm129
    %vm162 = vmor %vm94, %vm130
    %vm163 = vmor %vm95, %vm131
    %vm164 = vmor %vm96, %vm132
    %vm165 = vmor %vm97, %vm133
    %vm166 = vmor %vm98, %vm134
    %vm167 = vmor %vm99, %vm135
    %vm168 = vmor %vm100, %vm136
    %vm169 = vmor %vm101, %vm137
    %vm170 = vmor %vm102, %vm138
    %vm171 = vmor %vm103, %vm139
    %vm172 = vmor %vm104, %vm140
    %vm173 = vmor %vm105, %vm141
    %vm174 = vmor %vm106, %vm142
    %vm175 = vmor %vm107, %vm143
    %vm176 = vmor %vm108, %vm144
    %v177 = vsel %vm145, 1.0, 0.0
    %v178 = vsel %vm146, 1.0, 0.0
    %v179 = vsel %vm147, 1.0, 0.0
    %v180 = vsel %vm148, 1.0, 0.0
    %v181 = vsel %vm149, 1.0, 0.0
    %v182 = vsel %vm150, 1.0, 0.0
    %v183 = vsel %vm151, 1.0, 0.0
    %v184 = vsel %vm152, 1.0, 0.0
    %v185 = vsel %vm153, 1.0, 0.0
    %v186 = vsel %vm154, 1.0, 0.0
    %v187 = vsel %vm155, 1.0, 0.0
    %v188 = vsel %vm156, 1.0, 0.0
    %v189 = vsel %vm157, 1.0, 0.0
    %v190 = vsel %vm158, 1.0, 0.0
    %v191 = vsel %vm159, 1.0, 0.0
    %v192 = vsel %vm160, 1.0, 0.0
    %v193 = vsel %vm161, 1.0, 0.0
    %v194 = vsel %vm162, 1.0, 0.0
    %v195 = vsel %vm163, 1.0, 0.0
    %v196 = vsel %vm164, 1.0, 0.0
    %v197 = vsel %vm165, 1.0, 0.0
    %v198 = vsel %vm166, 1.0, 0.0
    %v199 = vsel %vm167, 1.0, 0.0
    %v200 = vsel %vm168, 1.0, 0.0
    %v201 = vsel %vm169, 1.0, 0.0
    %v202 = vsel %vm170, 1.0, 0.0
    %v203 = vsel %vm171, 1.0, 0.0
    %v204 = vsel %vm172, 1.0, 0.0
    %v205 = vsel %vm173, 1.0, 0.0
    %v206 = vsel %vm174, 1.0, 0.0
    %v207 = vsel %vm175, 1.0, 0.0
    %v208 = vsel %vm176, 1.0, 0.0
    %v209 = vpack.c.bf16 %v178, %v177
    %v210 = vpack.c.bf16 %v180, %v179
    %v211 = vpack.c.bf16 %v182, %v181
    %v212 = vpack.c.bf16 %v184, %v183
    %v213 = vpack.c.bf16 %v186, %v185
    %v214 = vpack.c.bf16 %v188, %v187
    %v215 = vpack.c.bf16 %v190, %v189
    %v216 = vpack.c.bf16 %v192, %v191
    %v217 = vpack.c.bf16 %v194, %v193
    %v218 = vpack.c.bf16 %v196, %v195
    %v219 = vpack.c.bf16 %v198, %v197
    %v220 = vpack.c.bf16 %v200, %v199
    %v221 = vpack.c.bf16 %v202, %v201
    %v222 = vpack.c.bf16 %v204, %v203
    %v223 = vpack.c.bf16 %v206, %v205
    %v224 = vpack.c.bf16 %v208, %v207
    %v225 = vld [vmem:[%s2] sm:$0xff]
    %v226 = vld [vmem:[%s2 + $0x8] sm:$0xff]
    %v227 = vld [vmem:[%s3] sm:$0xff]
    %v228 = vld [vmem:[%s3 + $0x8] sm:$0xff]
    %230 = vset.pattern.permute.xlu0 0
    %231 = vperm.xlu0 %230, %v227
    %v232 = vpop.permute.xlu0 %231
    %235 = vset.pattern.permute.xlu0 0
    %236 = vperm.xlu0 %235, %v228
    %v237 = vpop.permute.xlu0 %236
    %v241 = vunpack.c.l.b16 %v225
    %v242 = vunpack.c.h.b16 %v225
    %v243 = vunpack.c.l.b16 %v226
    %v244 = vunpack.c.h.b16 %v226
    %v245 = vpack.c.b16 %v243, %v241
    %v246 = vpack.c.b16 %v244, %v242
    %249 = vmatprep.subr.bf16.mxu0 0
    %250 = vmatpush1.bf16.msra.mxu0 %v216
    %251 = vmatprep.subr.bf16.mxu0 0
    %252 = vmatpush1.bf16.msra.mxu0 %v215
    %253 = vmatprep.subr.bf16.mxu0 0
    %254 = vmatpush1.bf16.msra.mxu0 %v214
    %255 = vmatprep.subr.bf16.mxu0 0
    %256 = vmatpush1.bf16.msra.mxu0 %v213
    %257 = vmatprep.subr.bf16.mxu0 0
    %258 = vmatpush1.bf16.msra.mxu0 %v212
    %259 = vmatprep.subr.bf16.mxu0 0
    %260 = vmatpush1.bf16.msra.mxu0 %v211
    %261 = vmatprep.subr.bf16.mxu0 0
    %262 = vmatpush1.bf16.msra.mxu0 %v210
    %263 = vmatprep.subr.bf16.mxu0 0
    %264 = vmatpush1.bf16.msra.mxu0 %v209
    %265 = vmatprep.subr.bf16.mxu0 0
    %266 = vmatpush2.bf16.msra.mxu0 %v224
    %267 = vmatprep.subr.bf16.mxu0 0
    %268 = vmatpush2.bf16.msra.mxu0 %v223
    %269 = vmatprep.subr.bf16.mxu0 0
    %270 = vmatpush2.bf16.msra.mxu0 %v222
    %271 = vmatprep.subr.bf16.mxu0 0
    %272 = vmatpush2.bf16.msra.mxu0 %v221
    %273 = vmatprep.subr.bf16.mxu0 0
    %274 = vmatpush2.bf16.msra.mxu0 %v220
    %275 = vmatprep.subr.bf16.mxu0 0
    %276 = vmatpush2.bf16.msra.mxu0 %v219
    %277 = vmatprep.subr.bf16.mxu0 0
    %278 = vmatpush2.bf16.msra.mxu0 %v218
    %279 = vmatprep.subr.bf16.mxu0 0
    %280 = vmatpush2.bf16.msra.mxu0 %v217
    %281 = vmatprep.mubr.bf16.mxu0 %v246
    %282 = vmatmul.mubr.bf16.gmra.mxu0 %v245
    %v283 = vpop.f32.mrf.mxu0
    %v284 = vadd.f32 %v232, %v283
    %v285 = vpop.f32.mrf.mxu0
    %v286 = vpop.f32.mrf.mxu0
    %v287 = vadd.f32 %v237, %v286
    %v288 = vpop.f32.mrf.mxu0
    %289 = vdwg.mxu0
    %v290 = vmax.f32 %v284, 0.0
    %v291 = vmax.f32 %v287, 0.0
    %v292 = vld [vmem:[%s4] sm:$0xff]
    %v293 = vld [vmem:[%s4 + $0x8] sm:$0xff]
    %295 = vset.pattern.permute.xlu0 0
    %296 = vperm.xlu0 %295, %v292
    %v297 = vpop.permute.xlu0 %296
    %300 = vset.pattern.permute.xlu0 0
    %301 = vperm.xlu0 %300, %v293
    %v302 = vpop.permute.xlu0 %301
    %v304 = vmul.f32 %v290, %v297
    %v305 = vmul.f32 %v291, %v302
    %v306 = vadd.f32 %v304, %v305
    %v307 = vrot.slane %v306, 4
    %v308 = vadd.f32 %v306, %v307
    %v309 = vrot.slane %v308, 2
    %v310 = vadd.f32 %v308, %v309
    %v311 = vrot.slane %v310, 1
    %v312 = vadd.f32 %v310, %v311
    %s313 = sld [smem:[#allocation2]]
    %s314 = sld [smem:[#allocation2 + $0x1]]
    %s315 = sld [smem:[#allocation2 + $0x2]]
    %v316 = vstv %s315
    %v317 = vadd.f32 %v312, %v316
    %v318 = vxor.u32 %v317, 2147483648
    %v319 = vmul.f32 %v318, 1.442695
    %v320 = vpow.pop %v319
    %v321 = vadd.f32 %v320, 1.0
    %v322 = vrcp.pop %v321
    %v323 = vmul.f32 1.0, %v322
    %s324 = ssub.f32 %s314, %s313
    %s325 = sadd.f32 %s324, 1.0
    %v326 = vstv %s325
    %v327 = vmul.f32 %v323, %v326
    %v328 = vstv %s313
    %v329 = vadd.f32 %v327, %v328
    %v330 = vsub.f32 %v329, 0.5
    %331 = vst [vmem:[#allocation5] sm:$0x1] %v330
    // Predicated region
    $region30: #{tpu_custom_call.1} parent=1 // pred_check
      _
    $region31: #{tpu_custom_call.1} parent=1 // pred_check_branch
      %333 = sbr.rel (0) target = $region33
    $region32: #{tpu_custom_call.1} parent=1 // pred_region
      %s335 = ssub.s32 16, 16
      %336 = vsyncadd [#allocation3], %s335
      %s338 = sshll.u32 [#allocation5], 4
      %s339 = int_to_ptr.vmem [resolvable:$true] %s338
      %341 = dma.vmem_to_hbm [thread:$0]  %s339, 16, %s6, [#allocation3]
    $region33: #{tpu_custom_call.1} parent=1 // pred_fallthru
      _
    // Predicated region
    $region34: #{tpu_custom_call.1} parent=1 // pred_check
      _
    $region35: #{tpu_custom_call.1} parent=1 // pred_check_branch
      %343 = sbr.rel (0) target = $region37
    $region36: #{tpu_custom_call.1} parent=1 // pred_region
      %344 = dma.done [#allocation3], 16
    $region37: #{tpu_custom_call.1} parent=1 // pred_fallthru
      _
    %345 = vsyncpa [#allocation3], 1
    %346 = vsyncpa [#allocation4], 1

</llo_original>
